<compile_context>
chip_gen: v7x
topology: tpu7x:2x2x1
jax: 0.10.0
libtpu: 0.0.40
codegen_flags: <defaults>
</compile_context>

<pallas_src>
import functools

import jax
import jax.numpy as jnp
import numpy as np
from jax.experimental import pallas as pl
from jax.experimental.pallas import tpu as pltpu


# ------------------------------ fused kernel -------------------------------

def _make_fused_kernel(num_layers, hidden_units, in_slab, vocab):
    H = hidden_units

    def kernel(tok_ref, w_ref, b_ref, h2o_w_ref, h2o_b_ref,
               h0_ref, c0_ref, logits_ref, h_out_ref, c_out_ref, xh_ref):
        B = tok_ref.shape[0]

        # One-hot of the input token, written across the full input slab so no
        # uninitialized VMEM lanes feed the matmul.  Columns >= vocab can never
        # match (tokens < vocab) -> they are exact zeros.
        eq = jax.lax.broadcasted_iota(jnp.int32, (B, in_slab), 1) == tok_ref[...]
        xh_ref[:, :in_slab] = eq.astype(jnp.float32)

        h_new = None
        for l in range(num_layers):                       # static, unrolled
            # [input | h] occupy adjacent lane slices of one VMEM scratch so
            # the fused [W_in ; W_hh] weight needs a single MXU pass/layer.
            xh_ref[:, in_slab:] = h0_ref[l]
            gates = (jnp.dot(xh_ref[...], w_ref[l],
                             preferred_element_type=jnp.float32)
                     + b_ref[l])                          # (B, 4H): i,f,g,o
            i_g = jax.nn.sigmoid(gates[:, 0 * H:1 * H])
            f_g = jax.nn.sigmoid(gates[:, 1 * H:2 * H])
            g_g = jnp.tanh(gates[:, 2 * H:3 * H])
            o_g = jax.nn.sigmoid(gates[:, 3 * H:4 * H])
            c_new = f_g * c0_ref[l] + i_g * g_g
            h_new = o_g * jnp.tanh(c_new)
            h_out_ref[l] = h_new
            c_out_ref[l] = c_new
            if l + 1 < num_layers:
                # Next layer's input.  Stale columns in [H:in_slab) multiply
                # zero-padded weight rows -> no re-zeroing needed.
                xh_ref[:, :H] = h_new

        # h2o projection, lane-dense (output padded to a multiple of 128).
        logits_ref[...] = (jnp.dot(h_new, h2o_w_ref[...],
                                   preferred_element_type=jnp.float32)
                           + h2o_b_ref[...])

    return kernel


@functools.partial(jax.jit, static_argnames=("draft_length",))
def rnn_forward(params, tokens, hidden, *, draft_length):
    """One forward step, matching RNN.forward:
    tokens (B, 1) int -> (logits (B, draft_length), (h (L,B,H), c (L,B,H)))."""
    w_fused = params["w_fused"]                 # (L, in_slab + H, 4H)
    L, K, H4 = w_fused.shape
    H = H4 // 4
    in_slab = K - H
    vocab = draft_length + 12
    B = tokens.shape[0]
    logit_pad = params["h2o_w"].shape[1]

    if hidden is None:
        h0 = jnp.zeros((L, B, H), jnp.float32)
        c0 = jnp.zeros((L, B, H), jnp.float32)
    else:
        h0, c0 = hidden

    kernel = _make_fused_kernel(L, H, in_slab, vocab)
    logits_pad, h, c = pl.pallas_call(
        kernel,
        out_shape=(
            jax.ShapeDtypeStruct((B, logit_pad), jnp.float32),
            jax.ShapeDtypeStruct((L, B, H), jnp.float32),
            jax.ShapeDtypeStruct((L, B, H), jnp.float32),
        ),
        # [input | h] slab kept in VMEM so each layer is one fused matmul.
        scratch_shapes=[pltpu.VMEM((B, K), jnp.float32)],
    )(tokens.astype(jnp.int32), w_fused, params["b_fused"],
      params["h2o_w"], params["h2o_b"], h0, c0)

    return logits_pad[:, :draft_length], (h, c)


# ------------------------- parameter construction --------------------------

def init_rnn_params(key, draft_length, embedding_dim, num_lstm_units,
                    num_lstm_layers):
    """PyTorch-shaped parameters, packed into the fused/padded kernel layout.
    Also returns the raw (PyTorch-layout) weights for a pure-JAX reference."""
    hp = jax.lax.Precision.HIGHEST
    vocab = draft_length + 12
    H = num_lstm_units
    E = embedding_dim
    in_slab = max(vocab, H)          # layer-0 input = one-hot (vocab wide)
    K = in_slab + H
    logit_pad = ((draft_length + 127) // 128) * 128

    k_emb, k_lstm, k_h2o = jax.random.split(key, 3)

    # nn.Embedding(vocab, E): N(0,1).
    emb = jax.random.normal(k_emb, (vocab, E), jnp.float32)

    # nn.LSTM per-layer weights, U(-1/sqrt(H), 1/sqrt(H)); fuse [W_in; W_hh].
    bound = 1.0 / float(np.sqrt(H))
    keys = jax.random.split(k_lstm, num_lstm_layers * 4)
    w_fused, b_fused = [], []
    raw_wih, raw_whh, raw_bih, raw_bhh = [], [], [], []
    for l in range(num_lstm_layers):
        in_sz = E if l == 0 else H
        kw1, kw2, kb1, kb2 = keys[4 * l:4 * l + 4]
        w_ih = jax.random.uniform(kw1, (4 * H, in_sz), jnp.float32, -bound, bound)
        w_hh = jax.random.uniform(kw2, (4 * H, H), jnp.float32, -bound, bound)
        b_ih = jax.random.uniform(kb1, (4 * H,), jnp.float32, -bound, bound)
        b_hh = jax.random.uniform(kb2, (4 * H,), jnp.float32, -bound, bound)
        w_l = jnp.zeros((K, 4 * H), jnp.float32)
        if l == 0:
            # Fold the embedding gather into the layer-0 input weights:
            # one-hot @ (emb @ W_ih0^T) == gather(emb) @ W_ih0^T.
            w_l = w_l.at[:vocab, :].set(jnp.dot(emb, w_ih.T, precision=hp))
        else:
            w_l = w_l.at[:H, :].set(w_ih.T)
        w_l = w_l.at[in_slab:, :].set(w_hh.T)     # recurrent part
        w_fused.append(w_l)
        b_fused.append((b_ih + b_hh)[None, :])    # (1, 4H)
        raw_wih.append(w_ih); raw_whh.append(w_hh)
        raw_bih.append(b_ih); raw_bhh.append(b_hh)

    # nn.Linear(H, draft_length), padded to 128 lane-dense output columns.
    kw, kb = jax.random.split(k_h2o)
    w_out = jax.random.uniform(kw, (draft_length, H), jnp.float32, -bound, bound)
    b_out = jax.random.uniform(kb, (draft_length,), jnp.float32, -bound, bound)
    h2o_w = jnp.zeros((H, logit_pad), jnp.float32).at[:, :draft_length].set(w_out.T)
    h2o_b = jnp.zeros((1, logit_pad), jnp.float32).at[0, :draft_length].set(b_out)

    params = {
        "w_fused": jnp.stack(w_fused),    # (L, in_slab + H, 4H)
        "b_fused": jnp.stack(b_fused),    # (L, 1, 4H) = b_ih + b_hh
        "h2o_w": h2o_w,                   # (H, logit_pad)
        "h2o_b": h2o_b,                   # (1, logit_pad)
    }
    raw = {
        "embedding": emb, "w_ih": raw_wih, "w_hh": raw_whh,
        "b_ih": raw_bih, "b_hh": raw_bhh, "w_out": w_out, "b_out": b_out,
    }
    return params, raw


# -------------------------- pure-JAX reference ------------------------------

def rnn_forward_ref(raw, tokens, hidden, draft_length):
    hp = jax.lax.Precision.HIGHEST
    x = jnp.take(raw["embedding"], tokens[:, 0], axis=0)
    L = len(raw["w_ih"])
    B = tokens.shape[0]
    H = raw["w_hh"][0].shape[1]
    if hidden is None:
        h0 = jnp.zeros((L, B, H), jnp.float32)
        c0 = jnp.zeros((L, B, H), jnp.float32)
    else:
        h0, c0 = hidden
    hs, cs = [], []
    for l in range(L):
        gates = (jnp.dot(x, raw["w_ih"][l].T, precision=hp) + raw["b_ih"][l]
                 + jnp.dot(h0[l], raw["w_hh"][l].T, precision=hp) + raw["b_hh"][l])
        i = jax.nn.sigmoid(gates[:, 0 * H:1 * H])
        f = jax.nn.sigmoid(gates[:, 1 * H:2 * H])
        g = jnp.tanh(gates[:, 2 * H:3 * H])
        o = jax.nn.sigmoid(gates[:, 3 * H:4 * H])
        c = f * c0[l] + i * g
        h = o * jnp.tanh(c)
        hs.append(h); cs.append(c)
        x = h
    logits = jnp.dot(x, raw["w_out"].T, precision=hp) + raw["b_out"]
    return logits, (jnp.stack(hs), jnp.stack(cs))


# ---------------------------------- main ------------------------------------

if __name__ == "__main__":
    draft_length = 10
    embedding_dim = 16
    num_lstm_units = 32
    num_lstm_layers = 2
    batch = 2

    key = jax.random.PRNGKey(0)
    k_params, k_tok = jax.random.split(key)

    params, raw = init_rnn_params(k_params, draft_length, embedding_dim,
                                  num_lstm_units, num_lstm_layers)
    tokens = jax.random.randint(
        k_tok, (batch, 1), minval=0, maxval=draft_length + 12, dtype=jnp.int32)

    # step 1: hidden is None;  step 2: feed back the returned hidden state.
    logits, (h, c) = rnn_forward(params, tokens, None,
                                 draft_length=draft_length)
    logits2, (h2, c2) = rnn_forward(params, tokens, (h, c),
                                    draft_length=draft_length)
    jax.block_until_ready((logits, h, c, logits2, h2, c2))

    assert logits.shape == (batch, draft_length)
    assert h.shape == (num_lstm_layers, batch, num_lstm_units)
    assert c.shape == (num_lstm_layers, batch, num_lstm_units)
    assert logits2.shape == (batch, draft_length)

    # numerical check vs. pure-JAX (PyTorch-semantics) reference
    rl, (rh, rc) = rnn_forward_ref(raw, tokens, None, draft_length)
    rl2, (rh2, rc2) = rnn_forward_ref(raw, tokens, (rh, rc), draft_length)
    np.testing.assert_allclose(np.asarray(logits), np.asarray(rl),
                               rtol=2e-2, atol=2e-2)
    np.testing.assert_allclose(np.asarray(h), np.asarray(rh),
                               rtol=2e-2, atol=2e-2)
    np.testing.assert_allclose(np.asarray(c), np.asarray(rc),
                               rtol=2e-2, atol=2e-2)
    np.testing.assert_allclose(np.asarray(logits2), np.asarray(rl2),
                               rtol=2e-2, atol=2e-2)

    print("KERNEL_OK")
</pallas_src>

<mosaic_0001>
module attributes {stable_mosaic.version = 11 : i64} {
  func.func @kernel(%arg0: memref<2x1xi32, #tpu.memory_space<vmem>>, %arg1: memref<2x64x128xf32, #tpu.memory_space<vmem>>, %arg2: memref<2x1x128xf32, #tpu.memory_space<vmem>>, %arg3: memref<32x128xf32, #tpu.memory_space<vmem>>, %arg4: memref<1x128xf32, #tpu.memory_space<vmem>>, %arg5: memref<2x2x32xf32, #tpu.memory_space<vmem>>, %arg6: memref<2x2x32xf32, #tpu.memory_space<vmem>>, %arg7: memref<2x128xf32, #tpu.memory_space<vmem>>, %arg8: memref<2x2x32xf32, #tpu.memory_space<vmem>>, %arg9: memref<2x2x32xf32, #tpu.memory_space<vmem>>, %arg10: memref<2x64xf32, #tpu.memory_space<vmem>>) attributes {dimension_semantics = [], scalar_prefetch = 0 : i64, scratch_operands = 1 : i64, tpu.core_type = #tpu.core_type<tc>} {
    %0 = tpu.iota {dimensions = array<i32: 1>} : vector<2x32xi32>
    %c0 = arith.constant 0 : index
    %c0_0 = arith.constant 0 : index
    %1 = vector.load %arg0[%c0, %c0_0] : memref<2x1xi32, #tpu.memory_space<vmem>>, vector<2x1xi32>
    %2 = vector.broadcast %1 : vector<2x1xi32> to vector<2x32xi32>
    %3 = arith.cmpi eq, %0, %2 : vector<2x32xi32>
    %4 = arith.extui %3 : vector<2x32xi1> to vector<2x32xi32>
    %5 = arith.sitofp %4 : vector<2x32xi32> to vector<2x32xf32>
    %c0_1 = arith.constant 0 : index
    %c0_2 = arith.constant 0 : index
    %6 = vector.load %arg10[%c0_1, %c0_2] : memref<2x64xf32, #tpu.memory_space<vmem>>, vector<2x32xf32>
    tpu.vector_store %arg10[%c0_1, %c0_2], %5 {strides = array<i32>} : memref<2x64xf32, #tpu.memory_space<vmem>>, vector<2x32xf32>,
    %c0_3 = arith.constant 0 : index
    %c0_4 = arith.constant 0 : index
    %c0_5 = arith.constant 0 : index
    %7 = vector.load %arg5[%c0_3, %c0_4, %c0_5] : memref<2x2x32xf32, #tpu.memory_space<vmem>>, vector<1x2x32xf32>
    %8 = vector.shape_cast %7 : vector<1x2x32xf32> to vector<2x32xf32>
    %c0_6 = arith.constant 0 : index
    %c32 = arith.constant 32 : index
    %9 = vector.load %arg10[%c0_6, %c32] : memref<2x64xf32, #tpu.memory_space<vmem>>, vector<2x32xf32>
    tpu.vector_store %arg10[%c0_6, %c32], %8 {strides = array<i32>} : memref<2x64xf32, #tpu.memory_space<vmem>>, vector<2x32xf32>,
    %c0_7 = arith.constant 0 : index
    %c0_8 = arith.constant 0 : index
    %10 = vector.load %arg10[%c0_7, %c0_8] : memref<2x64xf32, #tpu.memory_space<vmem>>, vector<2x64xf32>
    %c0_9 = arith.constant 0 : index
    %c0_10 = arith.constant 0 : index
    %c0_11 = arith.constant 0 : index
    %11 = vector.load %arg1[%c0_9, %c0_10, %c0_11] : memref<2x64x128xf32, #tpu.memory_space<vmem>>, vector<1x64x128xf32>
    %12 = vector.shape_cast %11 : vector<1x64x128xf32> to vector<64x128xf32>
    %cst = arith.constant dense<0.000000e+00> : vector<2x128xf32>
    %13 = tpu.matmul %10, %12, %cst {dimension_numbers = #tpu.dot_dimension_numbers<[1], [0], [0], [1], [0, 0, 1, 1], [], []>} : vector<2x64xf32>, vector<64x128xf32>, vector<2x128xf32> -> vector<2x128xf32>
    %c0_12 = arith.constant 0 : index
    %c0_13 = arith.constant 0 : index
    %c0_14 = arith.constant 0 : index
    %14 = vector.load %arg2[%c0_12, %c0_13, %c0_14] : memref<2x1x128xf32, #tpu.memory_space<vmem>>, vector<1x1x128xf32>
    %15 = vector.shape_cast %14 : vector<1x1x128xf32> to vector<1x128xf32>
    %16 = vector.broadcast %15 : vector<1x128xf32> to vector<2x128xf32>
    %17 = arith.addf %13, %16 : vector<2x128xf32>
    %18 = vector.extract_strided_slice %17 {offsets = [0, 0], sizes = [2, 32], strides = [1, 1]} : vector<2x128xf32> to vector<2x32xf32>
    %19 = arith.negf %18 : vector<2x32xf32>
    %20 = math.exp %19 : vector<2x32xf32>
    %cst_15 = arith.constant 1.000000e+00 : f32
    %21 = vector.broadcast %cst_15 : f32 to vector<2x32xf32>
    %22 = arith.addf %21, %20 : vector<2x32xf32>
    %23 = arith.divf %21, %22 : vector<2x32xf32>
    %24 = vector.extract_strided_slice %17 {offsets = [0, 32], sizes = [2, 32], strides = [1, 1]} : vector<2x128xf32> to vector<2x32xf32>
    %25 = arith.negf %24 : vector<2x32xf32>
    %26 = math.exp %25 : vector<2x32xf32>
    %cst_16 = arith.constant 1.000000e+00 : f32
    %27 = vector.broadcast %cst_16 : f32 to vector<2x32xf32>
    %28 = arith.addf %27, %26 : vector<2x32xf32>
    %29 = arith.divf %27, %28 : vector<2x32xf32>
    %30 = vector.extract_strided_slice %17 {offsets = [0, 64], sizes = [2, 32], strides = [1, 1]} : vector<2x128xf32> to vector<2x32xf32>
    %31 = math.tanh %30 : vector<2x32xf32>
    %32 = vector.extract_strided_slice %17 {offsets = [0, 96], sizes = [2, 32], strides = [1, 1]} : vector<2x128xf32> to vector<2x32xf32>
    %33 = arith.negf %32 : vector<2x32xf32>
    %34 = math.exp %33 : vector<2x32xf32>
    %cst_17 = arith.constant 1.000000e+00 : f32
    %35 = vector.broadcast %cst_17 : f32 to vector<2x32xf32>
    %36 = arith.addf %35, %34 : vector<2x32xf32>
    %37 = arith.divf %35, %36 : vector<2x32xf32>
    %c0_18 = arith.constant 0 : index
    %c0_19 = arith.constant 0 : index
    %c0_20 = arith.constant 0 : index
    %38 = vector.load %arg6[%c0_18, %c0_19, %c0_20] : memref<2x2x32xf32, #tpu.memory_space<vmem>>, vector<1x2x32xf32>
    %39 = vector.shape_cast %38 : vector<1x2x32xf32> to vector<2x32xf32>
    %40 = arith.mulf %29, %39 : vector<2x32xf32>
    %41 = arith.mulf %23, %31 : vector<2x32xf32>
    %42 = arith.addf %40, %41 : vector<2x32xf32>
    %43 = math.tanh %42 : vector<2x32xf32>
    %44 = arith.mulf %37, %43 : vector<2x32xf32>
    %c0_21 = arith.constant 0 : index
    %c0_22 = arith.constant 0 : index
    %c0_23 = arith.constant 0 : index
    %45 = vector.load %arg8[%c0_21, %c0_22, %c0_23] : memref<2x2x32xf32, #tpu.memory_space<vmem>>, vector<1x2x32xf32>
    %46 = vector.shape_cast %45 : vector<1x2x32xf32> to vector<2x32xf32>
    %47 = vector.shape_cast %44 : vector<2x32xf32> to vector<1x2x32xf32>
    tpu.vector_store %arg8[%c0_21, %c0_22, %c0_23], %47 {strides = array<i32>} : memref<2x2x32xf32, #tpu.memory_space<vmem>>, vector<1x2x32xf32>,
    %c0_24 = arith.constant 0 : index
    %c0_25 = arith.constant 0 : index
    %c0_26 = arith.constant 0 : index
    %48 = vector.load %arg9[%c0_24, %c0_25, %c0_26] : memref<2x2x32xf32, #tpu.memory_space<vmem>>, vector<1x2x32xf32>
    %49 = vector.shape_cast %48 : vector<1x2x32xf32> to vector<2x32xf32>
    %50 = vector.shape_cast %42 : vector<2x32xf32> to vector<1x2x32xf32>
    tpu.vector_store %arg9[%c0_24, %c0_25, %c0_26], %50 {strides = array<i32>} : memref<2x2x32xf32, #tpu.memory_space<vmem>>, vector<1x2x32xf32>,
    %c0_27 = arith.constant 0 : index
    %c0_28 = arith.constant 0 : index
    %51 = vector.load %arg10[%c0_27, %c0_28] : memref<2x64xf32, #tpu.memory_space<vmem>>, vector<2x32xf32>
    tpu.vector_store %arg10[%c0_27, %c0_28], %44 {strides = array<i32>} : memref<2x64xf32, #tpu.memory_space<vmem>>, vector<2x32xf32>,
    %c1 = arith.constant 1 : index
    %c0_29 = arith.constant 0 : index
    %c0_30 = arith.constant 0 : index
    %52 = vector.load %arg5[%c1, %c0_29, %c0_30] : memref<2x2x32xf32, #tpu.memory_space<vmem>>, vector<1x2x32xf32>
    %53 = vector.shape_cast %52 : vector<1x2x32xf32> to vector<2x32xf32>
    %c0_31 = arith.constant 0 : index
    %c32_32 = arith.constant 32 : index
    %54 = vector.load %arg10[%c0_31, %c32_32] : memref<2x64xf32, #tpu.memory_space<vmem>>, vector<2x32xf32>
    tpu.vector_store %arg10[%c0_31, %c32_32], %53 {strides = array<i32>} : memref<2x64xf32, #tpu.memory_space<vmem>>, vector<2x32xf32>,
    %c0_33 = arith.constant 0 : index
    %c0_34 = arith.constant 0 : index
    %55 = vector.load %arg10[%c0_33, %c0_34] : memref<2x64xf32, #tpu.memory_space<vmem>>, vector<2x64xf32>
    %c1_35 = arith.constant 1 : index
    %c0_36 = arith.constant 0 : index
    %c0_37 = arith.constant 0 : index
    %56 = vector.load %arg1[%c1_35, %c0_36, %c0_37] : memref<2x64x128xf32, #tpu.memory_space<vmem>>, vector<1x64x128xf32>
    %57 = vector.shape_cast %56 : vector<1x64x128xf32> to vector<64x128xf32>
    %cst_38 = arith.constant dense<0.000000e+00> : vector<2x128xf32>
    %58 = tpu.matmul %55, %57, %cst_38 {dimension_numbers = #tpu.dot_dimension_numbers<[1], [0], [0], [1], [0, 0, 1, 1], [], []>} : vector<2x64xf32>, vector<64x128xf32>, vector<2x128xf32> -> vector<2x128xf32>
    %c1_39 = arith.constant 1 : index
    %c0_40 = arith.constant 0 : index
    %c0_41 = arith.constant 0 : index
    %59 = vector.load %arg2[%c1_39, %c0_40, %c0_41] : memref<2x1x128xf32, #tpu.memory_space<vmem>>, vector<1x1x128xf32>
    %60 = vector.shape_cast %59 : vector<1x1x128xf32> to vector<1x128xf32>
    %61 = vector.broadcast %60 : vector<1x128xf32> to vector<2x128xf32>
    %62 = arith.addf %58, %61 : vector<2x128xf32>
    %63 = vector.extract_strided_slice %62 {offsets = [0, 0], sizes = [2, 32], strides = [1, 1]} : vector<2x128xf32> to vector<2x32xf32>
    %64 = arith.negf %63 : vector<2x32xf32>
    %65 = math.exp %64 : vector<2x32xf32>
    %cst_42 = arith.constant 1.000000e+00 : f32
    %66 = vector.broadcast %cst_42 : f32 to vector<2x32xf32>
    %67 = arith.addf %66, %65 : vector<2x32xf32>
    %68 = arith.divf %66, %67 : vector<2x32xf32>
    %69 = vector.extract_strided_slice %62 {offsets = [0, 32], sizes = [2, 32], strides = [1, 1]} : vector<2x128xf32> to vector<2x32xf32>
    %70 = arith.negf %69 : vector<2x32xf32>
    %71 = math.exp %70 : vector<2x32xf32>
    %cst_43 = arith.constant 1.000000e+00 : f32
    %72 = vector.broadcast %cst_43 : f32 to vector<2x32xf32>
    %73 = arith.addf %72, %71 : vector<2x32xf32>
    %74 = arith.divf %72, %73 : vector<2x32xf32>
    %75 = vector.extract_strided_slice %62 {offsets = [0, 64], sizes = [2, 32], strides = [1, 1]} : vector<2x128xf32> to vector<2x32xf32>
    %76 = math.tanh %75 : vector<2x32xf32>
    %77 = vector.extract_strided_slice %62 {offsets = [0, 96], sizes = [2, 32], strides = [1, 1]} : vector<2x128xf32> to vector<2x32xf32>
    %78 = arith.negf %77 : vector<2x32xf32>
    %79 = math.exp %78 : vector<2x32xf32>
    %cst_44 = arith.constant 1.000000e+00 : f32
    %80 = vector.broadcast %cst_44 : f32 to vector<2x32xf32>
    %81 = arith.addf %80, %79 : vector<2x32xf32>
    %82 = arith.divf %80, %81 : vector<2x32xf32>
    %c1_45 = arith.constant 1 : index
    %c0_46 = arith.constant 0 : index
    %c0_47 = arith.constant 0 : index
    %83 = vector.load %arg6[%c1_45, %c0_46, %c0_47] : memref<2x2x32xf32, #tpu.memory_space<vmem>>, vector<1x2x32xf32>
    %84 = vector.shape_cast %83 : vector<1x2x32xf32> to vector<2x32xf32>
    %85 = arith.mulf %74, %84 : vector<2x32xf32>
    %86 = arith.mulf %68, %76 : vector<2x32xf32>
    %87 = arith.addf %85, %86 : vector<2x32xf32>
    %88 = math.tanh %87 : vector<2x32xf32>
    %89 = arith.mulf %82, %88 : vector<2x32xf32>
    %c1_48 = arith.constant 1 : index
    %c0_49 = arith.constant 0 : index
    %c0_50 = arith.constant 0 : index
    %90 = vector.load %arg8[%c1_48, %c0_49, %c0_50] : memref<2x2x32xf32, #tpu.memory_space<vmem>>, vector<1x2x32xf32>
    %91 = vector.shape_cast %90 : vector<1x2x32xf32> to vector<2x32xf32>
    %92 = vector.shape_cast %89 : vector<2x32xf32> to vector<1x2x32xf32>
    tpu.vector_store %arg8[%c1_48, %c0_49, %c0_50], %92 {strides = array<i32>} : memref<2x2x32xf32, #tpu.memory_space<vmem>>, vector<1x2x32xf32>,
    %c1_51 = arith.constant 1 : index
    %c0_52 = arith.constant 0 : index
    %c0_53 = arith.constant 0 : index
    %93 = vector.load %arg9[%c1_51, %c0_52, %c0_53] : memref<2x2x32xf32, #tpu.memory_space<vmem>>, vector<1x2x32xf32>
    %94 = vector.shape_cast %93 : vector<1x2x32xf32> to vector<2x32xf32>
    %95 = vector.shape_cast %87 : vector<2x32xf32> to vector<1x2x32xf32>
    tpu.vector_store %arg9[%c1_51, %c0_52, %c0_53], %95 {strides = array<i32>} : memref<2x2x32xf32, #tpu.memory_space<vmem>>, vector<1x2x32xf32>,
    %c0_54 = arith.constant 0 : index
    %c0_55 = arith.constant 0 : index
    %96 = vector.load %arg3[%c0_54, %c0_55] : memref<32x128xf32, #tpu.memory_space<vmem>>, vector<32x128xf32>
    %cst_56 = arith.constant dense<0.000000e+00> : vector<2x128xf32>
    %97 = tpu.matmul %89, %96, %cst_56 {dimension_numbers = #tpu.dot_dimension_numbers<[1], [0], [0], [1], [0, 0, 1, 1], [], []>} : vector<2x32xf32>, vector<32x128xf32>, vector<2x128xf32> -> vector<2x128xf32>
    %c0_57 = arith.constant 0 : index
    %c0_58 = arith.constant 0 : index
    %98 = vector.load %arg4[%c0_57, %c0_58] : memref<1x128xf32, #tpu.memory_space<vmem>>, vector<1x128xf32>
    %99 = vector.broadcast %98 : vector<1x128xf32> to vector<2x128xf32>
    %100 = arith.addf %97, %99 : vector<2x128xf32>
    %c0_59 = arith.constant 0 : index
    %c0_60 = arith.constant 0 : index
    %101 = vector.load %arg7[%c0_59, %c0_60] : memref<2x128xf32, #tpu.memory_space<vmem>>, vector<2x128xf32>
    tpu.vector_store %arg7[%c0_59, %c0_60], %100 {strides = array<i32>} : memref<2x128xf32, #tpu.memory_space<vmem>>, vector<2x128xf32>,
    return
  }
}

</mosaic_0001>

<llo_original>
// kernel: rnn_forward.1
$region0: #{rnn_forward.1}
  #allocation0 [shape = 'u32[]', space=smem, size = 0x4, offset = 0x4, fixed_abs, tag = 'smem constant byte address 0x4 - core index']
  #allocation1 [shape = 'u32[144,128]{1,0:T(1,128)}', space=vmem, size = 0x12000, scoped, tag = 'internal scratch']
  #allocation2 [shape = 'f32[2,64]{1,0:T(2,128)}', space=vmem, size = 0x400, scoped, tag = 'scratch operand']
  %s0 = inlined_call_operand.vmem [shape: s32[2,1], index: 0, kind: input, shape index: {}]
  %s1 = inlined_call_operand.hbm [shape: f32[2,64,128], index: 1, kind: input, shape index: {}]
  %s2 = inlined_call_operand.vmem [shape: f32[2,1,128], index: 2, kind: input, shape index: {}]
  %s3 = inlined_call_operand.hbm [shape: f32[32,128], index: 3, kind: input, shape index: {}]
  %s4 = inlined_call_operand.vmem [shape: f32[1,128], index: 4, kind: input, shape index: {}]
  %s5 = inlined_call_operand.vmem [shape: f32[2,2,32], index: 5, kind: input, shape index: {}, may-alias: {5,6}]
  %s6 = inlined_call_operand.vmem [shape: f32[2,2,32], index: 6, kind: input, shape index: {}, may-alias: {5,6}]
  %s7 = inlined_call_operand.hbm [shape: f32[2,128], index: 7, kind: output, shape index: {0}]
  %s8 = inlined_call_operand.hbm [shape: f32[2,2,32], index: 8, kind: output, shape index: {1}]
  %s9 = inlined_call_operand.hbm [shape: f32[2,2,32], index: 9, kind: output, shape index: {2}]
  %10 = xla_tuple %s7, %s8, %s9
  %s11 = sld [smem:[#allocation0]]
  $region62: #{rnn_forward.1} parent=0
    _
  %s13 = ssub.s32 1, %s11
  %s14 = scalar_select 0, %s13, %s11
  $region1: #{rnn_forward.1} parent=0
    #allocation3 [shape = 'u8[65536]{0}', space=vmem, size = 0x10000, scoped, tag = 'input window, operand 1, single buffered']
    #allocation4 [shape = 's32[1]{0}', space=sflag, size = 0x4, scoped, tag = 'scoped memory for rnn_forward.1']
    #allocation5 [shape = 's32[1]{0}', space=sflag, size = 0x4, scoped, tag = 'scoped memory for rnn_forward.1']
    #allocation6 [shape = 'u8[16384]{0}', space=vmem, size = 0x4000, scoped, tag = 'input window, operand 3, single buffered']
    #allocation7 [shape = 's32[1]{0}', space=sflag, size = 0x4, scoped, tag = 'scoped memory for rnn_forward.1']
    #allocation8 [shape = 'u8[1024]{0}', space=vmem, size = 0x400, scoped, tag = 'output window, operand 0, single buffered']
    #allocation9 [shape = 'u8[2048]{0}', space=vmem, size = 0x800, scoped, tag = 'output window, operand 1, single buffered']
    #allocation10 [shape = 's32[1]{0}', space=sflag, size = 0x4, scoped, tag = 'scoped memory for rnn_forward.1']
    #allocation11 [shape = 'u8[2048]{0}', space=vmem, size = 0x800, scoped, tag = 'output window, operand 2, single buffered']
    %15 = vsyncpa [#allocation4], 0
    %16 = vsyncpa [#allocation7], 0
    %17 = vsyncpa [#allocation5], 0
    %18 = vsyncpa [#allocation10], 0
    // Predicated region
    $region2: #{rnn_forward.1} parent=1 // pred_check
      _
    $region3: #{rnn_forward.1} parent=1 // pred_check_branch
      %20 = sbr.rel (0) target = $region5
    $region4: #{rnn_forward.1} parent=1 // pred_region
      _
    $region5: #{rnn_forward.1} parent=1 // pred_fallthru
      _
    // Predicated region
    $region6: #{rnn_forward.1} parent=1 // pred_check
      _
    $region7: #{rnn_forward.1} parent=1 // pred_check_branch
      %22 = sbr.rel (0) target = $region9
    $region8: #{rnn_forward.1} parent=1 // pred_region
      %s24 = ssub.s32 2048, 2048
      %25 = vsyncadd [#allocation4], %s24
      %s26 = sshll.u32 [#allocation3], 4
      %s27 = int_to_ptr.vmem [resolvable:$true] %s26
      %32 = dma.hbm_to_vmem [thread:$0]  %s1, 2048, %s27, [#allocation4], 128, 128, 8
    $region9: #{rnn_forward.1} parent=1 // pred_fallthru
      _
    // Predicated region
    $region10: #{rnn_forward.1} parent=1 // pred_check
      _
    $region11: #{rnn_forward.1} parent=1 // pred_check_branch
      %34 = sbr.rel (0) target = $region13
    $region12: #{rnn_forward.1} parent=1 // pred_region
      _
    $region13: #{rnn_forward.1} parent=1 // pred_fallthru
      _
    // Predicated region
    $region14: #{rnn_forward.1} parent=1 // pred_check
      _
    $region15: #{rnn_forward.1} parent=1 // pred_check_branch
      %36 = sbr.rel (0) target = $region17
    $region16: #{rnn_forward.1} parent=1 // pred_region
      %s38 = ssub.s32 512, 512
      %39 = vsyncadd [#allocation7], %s38
      %s40 = sshll.u32 [#allocation6], 4
      %s41 = int_to_ptr.vmem [resolvable:$true] %s40
      %46 = dma.hbm_to_vmem [thread:$0]  %s3, 512, %s41, [#allocation7], 128, 128, 8
    $region17: #{rnn_forward.1} parent=1 // pred_fallthru
      _
    // Predicated region
    $region18: #{rnn_forward.1} parent=1 // pred_check
      _
    $region19: #{rnn_forward.1} parent=1 // pred_check_branch
      %48 = sbr.rel (0) target = $region21
    $region20: #{rnn_forward.1} parent=1 // pred_region
      _
    $region21: #{rnn_forward.1} parent=1 // pred_fallthru
      _
    // Predicated region
    $region22: #{rnn_forward.1} parent=1 // pred_check
      _
    $region23: #{rnn_forward.1} parent=1 // pred_check_branch
      %50 = sbr.rel (0) target = $region25
    $region24: #{rnn_forward.1} parent=1 // pred_region
      _
    $region25: #{rnn_forward.1} parent=1 // pred_fallthru
      _
    // Predicated region
    $region26: #{rnn_forward.1} parent=1 // pred_check
      _
    $region27: #{rnn_forward.1} parent=1 // pred_check_branch
      %52 = sbr.rel (0) target = $region29
    $region28: #{rnn_forward.1} parent=1 // pred_region
      _
    $region29: #{rnn_forward.1} parent=1 // pred_fallthru
      _
    // Predicated region
    $region30: #{rnn_forward.1} parent=1 // pred_check
      _
    $region31: #{rnn_forward.1} parent=1 // pred_check_branch
      %54 = sbr.rel (0) target = $region33
    $region32: #{rnn_forward.1} parent=1 // pred_region
      %55 = dma.done [#allocation4], 2048
    $region33: #{rnn_forward.1} parent=1 // pred_fallthru
      _
    // Predicated region
    $region34: #{rnn_forward.1} parent=1 // pred_check
      _
    $region35: #{rnn_forward.1} parent=1 // pred_check_branch
      %57 = sbr.rel (0) target = $region37
    $region36: #{rnn_forward.1} parent=1 // pred_region
      %58 = dma.done [#allocation7], 512
    $region37: #{rnn_forward.1} parent=1 // pred_fallthru
      _
    %v59 = vlaneseq
    %v60 = vand.u32 %v59, 127
    %v61 = vld [vmem:[%s0] sm:$0x3]
    %62 = vset.pattern.permute.xlu0 0
    %63 = vperm.xlu0 %62, %v61
    %v64 = vpop.permute.xlu0 %63
    %vm65 = vcmp.eq.s32.totalorder %v60, %v64
    %v66 = vsel %vm65, 1, 0
    %v67 = vcvt.s32.f32 %v66
    %vm68 = vcmask 254976
    %69 = vst.msk [vmem:[#allocation2] sm:$0x3] %vm68, %v67
    %v70 = vld [vmem:[%s5] sm:$0x3]
    %72 = vrot.lane.b32.xlu0 %v70, 32
    %v73 = vpop.permute.xlu0 %72
    %vm75 = vcmask 517376
    %76 = vst.msk [vmem:[#allocation2] sm:$0x3] %vm75, %v73
    %v77 = vld [vmem:[#allocation2] sm:$0x3]
    %v78 = vld [vmem:[#allocation3] sm:$0xff]
    %v79 = vld [vmem:[#allocation3 + $0x8] sm:$0xff]
    %v80 = vld [vmem:[#allocation3 + $0x10] sm:$0xff]
    %v81 = vld [vmem:[#allocation3 + $0x18] sm:$0xff]
    %v82 = vld [vmem:[#allocation3 + $0x20] sm:$0xff]
    %v83 = vld [vmem:[#allocation3 + $0x28] sm:$0xff]
    %v84 = vld [vmem:[#allocation3 + $0x30] sm:$0xff]
    %v85 = vld [vmem:[#allocation3 + $0x38] sm:$0xff]
    %v86 = vld [vmem:[%s2] sm:$0x1]
    %v88 = vlaneseq
    %v89 = vshrl.u32 %v88, 7
    %v90 = vsub.s32 0, %v89
    %v91 = vrot.slane %v86, %v90
    %vm93 = vcmask 523264
    %v95 = vsel %vm93, %v77, 0
    %97 = vmatprep.subr.mxu0 0.0
    %98 = vmatpush1.msra.mxu0 %v78
    %99 = vmatprep.subr.mxu0 0.0
    %100 = vmatpush1.msra.mxu0 %v79
    %101 = vmatprep.subr.mxu0 0.0
    %102 = vmatpush1.msra.mxu0 %v80
    %103 = vmatprep.subr.mxu0 0.0
    %104 = vmatpush1.msra.mxu0 %v81
    %105 = vmatprep.subr.mxu0 0.0
    %106 = vmatpush1.msra.mxu0 %v82
    %107 = vmatprep.subr.mxu0 0.0
    %108 = vmatpush1.msra.mxu0 %v83
    %109 = vmatprep.subr.mxu0 0.0
    %110 = vmatpush1.msra.mxu0 %v84
    %111 = vmatprep.subr.mxu0 0.0
    %112 = vmatpush1.msra.mxu0 %v85
    %113 = vmatprep.subr.mxu0 0.0
    %114 = vmatpush1.msra.mxu0 0.0
    %115 = vmatprep.subr.mxu0 0.0
    %116 = vmatpush1.msra.mxu0 0.0
    %117 = vmatprep.subr.mxu0 0.0
    %118 = vmatpush1.msra.mxu0 0.0
    %119 = vmatprep.subr.mxu0 0.0
    %120 = vmatpush1.msra.mxu0 0.0
    %121 = vmatprep.subr.mxu0 0.0
    %122 = vmatpush1.msra.mxu0 0.0
    %123 = vmatprep.subr.mxu0 0.0
    %124 = vmatpush1.msra.mxu0 0.0
    %125 = vmatprep.subr.mxu0 0.0
    %126 = vmatpush1.msra.mxu0 0.0
    %127 = vmatprep.subr.mxu0 0.0
    %128 = vmatpush1.msra.mxu0 0.0
    %129 = vmatprep.subr.mxu0 0.0
    %130 = vmatpush1.msra.mxu0 0.0
    %131 = vmatprep.subr.mxu0 0.0
    %132 = vmatpush1.msra.mxu0 0.0
    %133 = vmatprep.subr.mxu0 0.0
    %134 = vmatpush1.msra.mxu0 0.0
    %135 = vmatprep.subr.mxu0 0.0
    %136 = vmatpush1.msra.mxu0 0.0
    %137 = vmatprep.subr.mxu0 0.0
    %138 = vmatpush1.msra.mxu0 0.0
    %139 = vmatprep.subr.mxu0 0.0
    %140 = vmatpush1.msra.mxu0 0.0
    %141 = vmatprep.subr.mxu0 0.0
    %142 = vmatpush1.msra.mxu0 0.0
    %143 = vmatprep.subr.mxu0 0.0
    %144 = vmatpush1.msra.mxu0 0.0
    %145 = vmatprep.subr.mxu0 0.0
    %146 = vmatpush1.msra.mxu0 0.0
    %147 = vmatprep.subr.mxu0 0.0
    %148 = vmatpush1.msra.mxu0 0.0
    %149 = vmatprep.subr.mxu0 0.0
    %150 = vmatpush1.msra.mxu0 0.0
    %151 = vmatprep.subr.mxu0 0.0
    %152 = vmatpush1.msra.mxu0 0.0
    %153 = vmatprep.subr.mxu0 0.0
    %154 = vmatpush1.msra.mxu0 0.0
    %155 = vmatprep.subr.mxu0 0.0
    %156 = vmatpush1.msra.mxu0 0.0
    %157 = vmatprep.subr.mxu0 0.0
    %158 = vmatpush1.msra.mxu0 0.0
    %159 = vmatprep.subr.mxu0 0.0
    %160 = vmatpush1.msra.mxu0 0.0
    %161 = vmatprep.mubr.f32.mxu0 0.0
    %162 = vmatmul.mubr.f32.gmra.mrb[0].mxu0 %v95
    %v163 = vpop.f32.mrb[0].mxu0
    %v164 = vadd.f32 %v91, %v163
    %v165 = vpop.f32.mrb[0].mxu0
    %166 = vdwg.mxu0
    %v167 = vxor.u32 %v164, 2147483648
    %v168 = vmul.f32 %v167, 1.442695
    %v169 = vpow.pop %v168
    %v170 = vadd.f32 %v169, 1.0
    %v171 = vrcp.pop %v170
    %v172 = vmul.f32 1.0, %v171
    %v173 = vtanh.pop %v164
    %v174 = vld [vmem:[%s6] sm:$0x3]
    %176 = vrot.lane.b32.xlu0 %v174, 32
    %v177 = vpop.permute.xlu0 %176
    %v179 = vmul.f32 %v172, %v177
    %181 = vrot.lane.b32.xlu0 %v173, 64
    %v182 = vpop.permute.xlu0 %181
    %v184 = vmul.f32 %v172, %v182
    %186 = vrot.lane.b32.xlu0 %v184, 32
    %v187 = vpop.permute.xlu0 %186
    %v189 = vadd.f32 %v179, %v187
    %v190 = vtanh.pop %v189
    %192 = vrot.lane.b32.xlu0 %v190, 64
    %v193 = vpop.permute.xlu0 %192
    %v195 = vmul.f32 %v172, %v193
    %197 = vrot.lane.b32.xlu0 %v195, 32
    %v198 = vpop.permute.xlu0 %197
    %200 = vst.msk [vmem:[#allocation9] sm:$0x3] %vm68, %v198
    %202 = vrot.lane.b32.xlu0 %v189, 96
    %v203 = vpop.permute.xlu0 %202
    %205 = vst.msk [vmem:[#allocation11] sm:$0x3] %vm68, %v203
    %206 = vst.msk [vmem:[#allocation2] sm:$0x3] %vm68, %v198
    %s207 = scalar_lea.vmem %s5, 2
    %v208 = vld [vmem:[%s207] sm:$0x3]
    %210 = vrot.lane.b32.xlu0 %v208, 32
    %v211 = vpop.permute.xlu0 %210
    %213 = vst.msk [vmem:[#allocation2] sm:$0x3] %vm75, %v211
    %v214 = vld [vmem:[#allocation2] sm:$0x3]
    %s215 = scalar_lea.vmem [#allocation3], 64
    %v216 = vld [vmem:[%s215] sm:$0xff]
    %v217 = vld [vmem:[%s215 + $0x8] sm:$0xff]
    %v218 = vld [vmem:[%s215 + $0x10] sm:$0xff]
    %v219 = vld [vmem:[%s215 + $0x18] sm:$0xff]
    %v220 = vld [vmem:[%s215 + $0x20] sm:$0xff]
    %v221 = vld [vmem:[%s215 + $0x28] sm:$0xff]
    %v222 = vld [vmem:[%s215 + $0x30] sm:$0xff]
    %v223 = vld [vmem:[%s215 + $0x38] sm:$0xff]
    %s224 = scalar_lea.vmem %s2, 1
    %v225 = vld [vmem:[%s224] sm:$0x1]
    %v227 = vlaneseq
    %v228 = vshrl.u32 %v227, 7
    %v229 = vsub.s32 0, %v228
    %v230 = vrot.slane %v225, %v229
    %v233 = vsel %vm93, %v214, 0
    %235 = vmatprep.subr.mxu0 0.0
    %236 = vmatpush1.msra.mxu0 %v216
    %237 = vmatprep.subr.mxu0 0.0
    %238 = vmatpush1.msra.mxu0 %v217
    %239 = vmatprep.subr.mxu0 0.0
    %240 = vmatpush1.msra.mxu0 %v218
    %241 = vmatprep.subr.mxu0 0.0
    %242 = vmatpush1.msra.mxu0 %v219
    %243 = vmatprep.subr.mxu0 0.0
    %244 = vmatpush1.msra.mxu0 %v220
    %245 = vmatprep.subr.mxu0 0.0
    %246 = vmatpush1.msra.mxu0 %v221
    %247 = vmatprep.subr.mxu0 0.0
    %248 = vmatpush1.msra.mxu0 %v222
    %249 = vmatprep.subr.mxu0 0.0
    %250 = vmatpush1.msra.mxu0 %v223
    %251 = vmatprep.subr.mxu0 0.0
    %252 = vmatpush1.msra.mxu0 0.0
    %253 = vmatprep.subr.mxu0 0.0
    %254 = vmatpush1.msra.mxu0 0.0
    %255 = vmatprep.subr.mxu0 0.0
    %256 = vmatpush1.msra.mxu0 0.0
    %257 = vmatprep.subr.mxu0 0.0
    %258 = vmatpush1.msra.mxu0 0.0
    %259 = vmatprep.subr.mxu0 0.0
    %260 = vmatpush1.msra.mxu0 0.0
    %261 = vmatprep.subr.mxu0 0.0
    %262 = vmatpush1.msra.mxu0 0.0
    %263 = vmatprep.subr.mxu0 0.0
    %264 = vmatpush1.msra.mxu0 0.0
    %265 = vmatprep.subr.mxu0 0.0
    %266 = vmatpush1.msra.mxu0 0.0
    %267 = vmatprep.subr.mxu0 0.0
    %268 = vmatpush1.msra.mxu0 0.0
    %269 = vmatprep.subr.mxu0 0.0
    %270 = vmatpush1.msra.mxu0 0.0
    %271 = vmatprep.subr.mxu0 0.0
    %272 = vmatpush1.msra.mxu0 0.0
    %273 = vmatprep.subr.mxu0 0.0
    %274 = vmatpush1.msra.mxu0 0.0
    %275 = vmatprep.subr.mxu0 0.0
    %276 = vmatpush1.msra.mxu0 0.0
    %277 = vmatprep.subr.mxu0 0.0
    %278 = vmatpush1.msra.mxu0 0.0
    %279 = vmatprep.subr.mxu0 0.0
    %280 = vmatpush1.msra.mxu0 0.0
    %281 = vmatprep.subr.mxu0 0.0
    %282 = vmatpush1.msra.mxu0 0.0
    %283 = vmatprep.subr.mxu0 0.0
    %284 = vmatpush1.msra.mxu0 0.0
    %285 = vmatprep.subr.mxu0 0.0
    %286 = vmatpush1.msra.mxu0 0.0
    %287 = vmatprep.subr.mxu0 0.0
    %288 = vmatpush1.msra.mxu0 0.0
    %289 = vmatprep.subr.mxu0 0.0
    %290 = vmatpush1.msra.mxu0 0.0
    %291 = vmatprep.subr.mxu0 0.0
    %292 = vmatpush1.msra.mxu0 0.0
    %293 = vmatprep.subr.mxu0 0.0
    %294 = vmatpush1.msra.mxu0 0.0
    %295 = vmatprep.subr.mxu0 0.0
    %296 = vmatpush1.msra.mxu0 0.0
    %297 = vmatprep.subr.mxu0 0.0
    %298 = vmatpush1.msra.mxu0 0.0
    %299 = vmatprep.mubr.f32.mxu0 0.0
    %300 = vmatmul.mubr.f32.gmra.mrb[0].mxu0 %v233
    %v301 = vpop.f32.mrb[0].mxu0
    %v302 = vadd.f32 %v230, %v301
    %v303 = vpop.f32.mrb[0].mxu0
    %304 = vdwg.mxu0
    %v305 = vxor.u32 %v302, 2147483648
    %v306 = vmul.f32 %v305, 1.442695
    %v307 = vpow.pop %v306
    %v308 = vadd.f32 %v307, 1.0
    %v309 = vrcp.pop %v308
    %v310 = vmul.f32 1.0, %v309
    %v311 = vtanh.pop %v302
    %s312 = scalar_lea.vmem %s6, 2
    %v313 = vld [vmem:[%s312] sm:$0x3]
    %315 = vrot.lane.b32.xlu0 %v313, 32
    %v316 = vpop.permute.xlu0 %315
    %v318 = vmul.f32 %v310, %v316
    %320 = vrot.lane.b32.xlu0 %v311, 64
    %v321 = vpop.permute.xlu0 %320
    %v323 = vmul.f32 %v310, %v321
    %325 = vrot.lane.b32.xlu0 %v323, 32
    %v326 = vpop.permute.xlu0 %325
    %v328 = vadd.f32 %v318, %v326
    %v329 = vtanh.pop %v328
    %331 = vrot.lane.b32.xlu0 %v329, 64
    %v332 = vpop.permute.xlu0 %331
    %v334 = vmul.f32 %v310, %v332
    %336 = vrot.lane.b32.xlu0 %v334, 32
    %v337 = vpop.permute.xlu0 %336
    %s339 = scalar_lea.vmem [#allocation9], 2
    %340 = vst.msk [vmem:[%s339] sm:$0x3] %vm68, %v337
    %342 = vrot.lane.b32.xlu0 %v328, 96
    %v343 = vpop.permute.xlu0 %342
    %s345 = scalar_lea.vmem [#allocation11], 2
    %346 = vst.msk [vmem:[%s345] sm:$0x3] %vm68, %v343
    %v347 = vld [vmem:[#allocation6] sm:$0xff]
    %v348 = vld [vmem:[#allocation6 + $0x8] sm:$0xff]
    %v349 = vld [vmem:[#allocation6 + $0x10] sm:$0xff]
    %v350 = vld [vmem:[#allocation6 + $0x18] sm:$0xff]
    %v351 = vld [vmem:[%s4] sm:$0x1]
    %v353 = vlaneseq
    %v354 = vshrl.u32 %v353, 7
    %v355 = vsub.s32 0, %v354
    %v356 = vrot.slane %v351, %v355
    %vm358 = vcmask 261120
    %v359 = vsel %vm358, %v337, 0
    %361 = vmatprep.subr.mxu0 0.0
    %362 = vmatpush1.msra.mxu0 %v347
    %363 = vmatprep.subr.mxu0 0.0
    %364 = vmatpush1.msra.mxu0 %v348
    %365 = vmatprep.subr.mxu0 0.0
    %366 = vmatpush1.msra.mxu0 %v349
    %367 = vmatprep.subr.mxu0 0.0
    %368 = vmatpush1.msra.mxu0 %v350
    %369 = vmatprep.subr.mxu0 0.0
    %370 = vmatpush1.msra.mxu0 0.0
    %371 = vmatprep.subr.mxu0 0.0
    %372 = vmatpush1.msra.mxu0 0.0
    %373 = vmatprep.subr.mxu0 0.0
    %374 = vmatpush1.msra.mxu0 0.0
    %375 = vmatprep.subr.mxu0 0.0
    %376 = vmatpush1.msra.mxu0 0.0
    %377 = vmatprep.subr.mxu0 0.0
    %378 = vmatpush1.msra.mxu0 0.0
    %379 = vmatprep.subr.mxu0 0.0
    %380 = vmatpush1.msra.mxu0 0.0
    %381 = vmatprep.subr.mxu0 0.0
    %382 = vmatpush1.msra.mxu0 0.0
    %383 = vmatprep.subr.mxu0 0.0
    %384 = vmatpush1.msra.mxu0 0.0
    %385 = vmatprep.subr.mxu0 0.0
    %386 = vmatpush1.msra.mxu0 0.0
    %387 = vmatprep.subr.mxu0 0.0
    %388 = vmatpush1.msra.mxu0 0.0
    %389 = vmatprep.subr.mxu0 0.0
    %390 = vmatpush1.msra.mxu0 0.0
    %391 = vmatprep.subr.mxu0 0.0
    %392 = vmatpush1.msra.mxu0 0.0
    %393 = vmatprep.subr.mxu0 0.0
    %394 = vmatpush1.msra.mxu0 0.0
    %395 = vmatprep.subr.mxu0 0.0
    %396 = vmatpush1.msra.mxu0 0.0
    %397 = vmatprep.subr.mxu0 0.0
    %398 = vmatpush1.msra.mxu0 0.0
    %399 = vmatprep.subr.mxu0 0.0
    %400 = vmatpush1.msra.mxu0 0.0
    %401 = vmatprep.subr.mxu0 0.0
    %402 = vmatpush1.msra.mxu0 0.0
    %403 = vmatprep.subr.mxu0 0.0
    %404 = vmatpush1.msra.mxu0 0.0
    %405 = vmatprep.subr.mxu0 0.0
    %406 = vmatpush1.msra.mxu0 0.0
    %407 = vmatprep.subr.mxu0 0.0
    %408 = vmatpush1.msra.mxu0 0.0
    %409 = vmatprep.subr.mxu0 0.0
    %410 = vmatpush1.msra.mxu0 0.0
    %411 = vmatprep.subr.mxu0 0.0
    %412 = vmatpush1.msra.mxu0 0.0
    %413 = vmatprep.subr.mxu0 0.0
    %414 = vmatpush1.msra.mxu0 0.0
    %415 = vmatprep.subr.mxu0 0.0
    %416 = vmatpush1.msra.mxu0 0.0
    %417 = vmatprep.subr.mxu0 0.0
    %418 = vmatpush1.msra.mxu0 0.0
    %419 = vmatprep.subr.mxu0 0.0
    %420 = vmatpush1.msra.mxu0 0.0
    %421 = vmatprep.subr.mxu0 0.0
    %422 = vmatpush1.msra.mxu0 0.0
    %423 = vmatprep.subr.mxu0 0.0
    %424 = vmatpush1.msra.mxu0 0.0
    %425 = vmatprep.mubr.f32.mxu0 0.0
    %426 = vmatmul.mubr.f32.gmra.mrb[0].mxu0 %v359
    %v427 = vpop.f32.mrb[0].mxu0
    %v428 = vadd.f32 %v356, %v427
    %v429 = vpop.f32.mrb[0].mxu0
    %430 = vdwg.mxu0
    %431 = vst [vmem:[#allocation8] sm:$0x3] %v428
    // Predicated region
    $region38: #{rnn_forward.1} parent=1 // pred_check
      _
    $region39: #{rnn_forward.1} parent=1 // pred_check_branch
      %433 = sbr.rel (0) target = $region41
    $region40: #{rnn_forward.1} parent=1 // pred_region
      %s435 = ssub.s32 32, 32
      %436 = vsyncadd [#allocation5], %s435
      %s438 = sshll.u32 [#allocation8], 4
      %s439 = int_to_ptr.vmem [resolvable:$true] %s438
      %441 = dma.vmem_to_hbm [thread:$0]  %s439, 32, %s7, [#allocation5]
    $region41: #{rnn_forward.1} parent=1 // pred_fallthru
      _
    // Predicated region
    $region42: #{rnn_forward.1} parent=1 // pred_check
      _
    $region43: #{rnn_forward.1} parent=1 // pred_check_branch
      %443 = sbr.rel (0) target = $region45
    $region44: #{rnn_forward.1} parent=1 // pred_region
      %s445 = ssub.s32 64, 64
      %446 = vsyncadd [#allocation10], %s445
      %s447 = sshll.u32 [#allocation9], 4
      %s448 = int_to_ptr.vmem [resolvable:$true] %s447
      %453 = dma.vmem_to_hbm [thread:$0]  %s448, 64, %s8, [#allocation10], 32, 32, 2
    $region45: #{rnn_forward.1} parent=1 // pred_fallthru
      _
    // Predicated region
    $region46: #{rnn_forward.1} parent=1 // pred_check
      _
    $region47: #{rnn_forward.1} parent=1 // pred_check_branch
      %455 = sbr.rel (0) target = $region49
    $region48: #{rnn_forward.1} parent=1 // pred_region
      %s457 = ssub.s32 64, 64
      %458 = vsyncadd [#allocation10], %s457
      %s459 = sshll.u32 [#allocation11], 4
      %s460 = int_to_ptr.vmem [resolvable:$true] %s459
      %465 = dma.vmem_to_hbm [thread:$0]  %s460, 64, %s9, [#allocation10], 32, 32, 2
    $region49: #{rnn_forward.1} parent=1 // pred_fallthru
      _
    // Predicated region
    $region50: #{rnn_forward.1} parent=1 // pred_check
      _
    $region51: #{rnn_forward.1} parent=1 // pred_check_branch
      %467 = sbr.rel (0) target = $region53
    $region52: #{rnn_forward.1} parent=1 // pred_region
      %468 = dma.done [#allocation5], 32
    $region53: #{rnn_forward.1} parent=1 // pred_fallthru
      _
    // Predicated region
    $region54: #{rnn_forward.1} parent=1 // pred_check
      _
    $region55: #{rnn_forward.1} parent=1 // pred_check_branch
      %470 = sbr.rel (0) target = $region57
    $region56: #{rnn_forward.1} parent=1 // pred_region
      %471 = dma.done [#allocation10], 64
    $region57: #{rnn_forward.1} parent=1 // pred_fallthru
      _
    // Predicated region
    $region58: #{rnn_forward.1} parent=1 // pred_check
      _
    $region59: #{rnn_forward.1} parent=1 // pred_check_branch
      %473 = sbr.rel (0) target = $region61
    $region60: #{rnn_forward.1} parent=1 // pred_region
      %474 = dma.done [#allocation10], 64
    $region61: #{rnn_forward.1} parent=1 // pred_fallthru
      _
    %475 = vsyncpa [#allocation4], 1
    %476 = vsyncpa [#allocation7], 1
    %477 = vsyncpa [#allocation5], 1
    %478 = vsyncpa [#allocation10], 1

</llo_original>
